<compile_context>
chip_gen: v7x
topology: tpu7x:2x2x1
jax: 0.10.0
libtpu: 0.0.40
codegen_flags: <defaults>
</compile_context>

<pallas_src>
import functools

import jax
import jax.numpy as jnp
from jax.experimental import pallas as pl
from jax.experimental.pallas import tpu as pltpu


def _round_up(x, m):
    return ((x + m - 1) // m) * m


def _group_sums(sq, ones_bd):
    """Per-timestep sums over the coordinate group via a ones matmul.

    The f32 operand is split into bf16 hi/lo halves so the MXU result is
    f32-accurate even if the default matmul precision truncates operands.
    """
    hi = sq.astype(jnp.bfloat16).astype(jnp.float32)
    lo = sq - hi
    return (jnp.dot(hi, ones_bd, preferred_element_type=jnp.float32)
            + jnp.dot(lo, ones_bd, preferred_element_type=jnp.float32))


def _step_distance_loss_kernel(pred_ref, target_ref, ones_ref, out_ref, *,
                               batch, block_b, time, coord):
    b = pl.program_id(0)
    fm = (time - 1) * coord                      # valid step lanes per row

    pred = pred_ref[...].astype(jnp.float32)     # (block_b, time*coord)
    target = target_ref[...].astype(jnp.float32)

    # Step vectors: in the lane-dense layout the time shift is a lane shift
    # by `coord`:  step[:, t*coord + d] = x[:, (t+1)*coord + d] - x[:, t*coord + d].
    pred_step = pred[:, coord:] - pred[:, :fm]       # (block_b, fm)
    target_step = target[:, coord:] - target[:, :fm]

    pred_sq = pred_step * pred_step
    target_sq = target_step * target_step

    # Per-timestep ||step||^2 via a block-diagonal ones matmul on the idle MXU.
    ones_bd = ones_ref[...]                      # (fm, time-1), 0/1 entries
    pred_ss = _group_sums(pred_sq, ones_bd)      # (block_b, time-1)
    target_ss = _group_sums(target_sq, ones_bd)

    diff = jnp.sqrt(pred_ss) - jnp.sqrt(target_ss)
    sq = diff * diff                             # (block_b, time-1)

    # Mask rows past the true batch size (ragged last block holds junk; the
    # select also drops any NaN/Inf produced from that junk).
    row = jax.lax.broadcasted_iota(jnp.int32, sq.shape, 0) + b * block_b
    sq = jnp.where(row < batch, sq, jnp.float32(0.0))

    partial = jnp.sum(sq)                        # one reduce per multi-MB block

    # One lane-dense (8, 128) output tile per grid step: partial at [0, 0],
    # zeros elsewhere (unmasked vector store; final sum happens in the wrapper).
    r = jax.lax.broadcasted_iota(jnp.int32, (1, 8, 128), 1)
    c = jax.lax.broadcasted_iota(jnp.int32, (1, 8, 128), 2)
    mask_tile = ((r == 0) & (c == 0)).astype(jnp.float32)
    out_ref[...] = mask_tile * partial


def _pick_vmem_limit_bytes():
    """Scoped-VMEM limit: half of physical VMEM, capped at 64 MiB.

    v5e / v6e (128 MiB physical) -> 64 MiB; v7x (64 MiB physical) -> 32 MiB.
    """
    try:
        cap = int(pltpu.get_tpu_info().vmem_capacity_bytes)
    except Exception:
        return 32 * 1024 * 1024
    return int(min(64 * 1024 * 1024, max(16 * 1024 * 1024, cap // 2)))


def step_distance_loss(pred_abs, target_abs, reduction="mean", block_b=None):
    """Pallas equivalent of StepDistanceLoss.forward.

    pred_abs, target_abs: (B, T, D) arrays. Returns a float32 scalar.
    """
    assert pred_abs.shape == target_abs.shape
    assert pred_abs.ndim == 3, "expected (batch, time, coord) inputs"
    B, T, D = pred_abs.shape
    assert T >= 2, "need at least two timesteps to form step distances"
    if reduction not in ("mean", "sum"):
        raise ValueError(f"unsupported reduction: {reduction}")

    F = T * D
    Fm = (T - 1) * D
    itemsize = jnp.dtype(pred_abs.dtype).itemsize

    # Lane-dense views: free, contiguous reshape (no data movement).
    pred2d = pred_abs.reshape(B, F)
    target2d = target_abs.reshape(B, F)

    # Block-diagonal ones matrix mapping step lanes -> timesteps:
    #   ones_bd[t*D + d, t] = 1.  Fetched into VMEM once (constant index_map).
    lane = jnp.arange(Fm, dtype=jnp.int32)
    tstep = jnp.arange(T - 1, dtype=jnp.int32)
    ones_bd = (lane[:, None] // D == tstep[None, :]).astype(jnp.float32)

    vmem_limit = _pick_vmem_limit_bytes()

    # block_b sized from the PADDED VMEM footprint (lanes rounded to 128,
    # sublanes to 8), not raw HBM bytes:
    #   2 inputs x 2 pipeline buffers (input dtype, lane-dense)
    #   + ~8 lane-dense f32 temporaries (casts, shifted steps, squares, hi/lo)
    #   + 2 (block_b, T-1) f32 results,  plus the resident ones_bd buffers.
    Fp = _round_up(F, 128)
    per_row = 4 * Fp * itemsize + 8 * Fp * 4 + 2 * _round_up(T - 1, 128) * 4
    fixed = 2 * _round_up(Fm, 8) * _round_up(T - 1, 128) * 4
    if block_b is None:
        budget = max(8 * per_row, (vmem_limit * 7) // 10 - fixed)
        block_b = budget // per_row
    block_b = int(block_b)
    if block_b >= B:
        block_b = B                             # single block == full dim (legal)
    else:
        block_b = max(8, (block_b // 8) * 8)    # interior blocks: multiple of 8
        if block_b >= B:
            block_b = B
    nb = pl.cdiv(B, block_b)
    # TODO(synk): for extremely long rows (T*D*itemsize approaching the VMEM
    # budget) a second grid axis over time (with a 1-step halo) would be needed.

    kernel = functools.partial(
        _step_distance_loss_kernel,
        batch=B, block_b=block_b, time=T, coord=D,
    )

    cost = pl.CostEstimate(
        flops=B * (T - 1) * (12 * D + 4),
        transcendentals=2 * B * (T - 1),
        bytes_accessed=(2 * B * T * D * itemsize
                        + Fm * (T - 1) * 4
                        + nb * 8 * 128 * 4),
    )

    partials = pl.pallas_call(
        kernel,
        out_shape=jax.ShapeDtypeStruct((nb, 8, 128), jnp.float32),
        grid=(nb,),
        in_specs=[
            pl.BlockSpec((block_b, F), lambda b: (b, 0)),
            pl.BlockSpec((block_b, F), lambda b: (b, 0)),
            pl.BlockSpec((Fm, T - 1), lambda b: (0, 0)),   # resident constant
        ],
        out_specs=pl.BlockSpec((1, 8, 128), lambda b: (b, 0, 0)),
        compiler_params=pltpu.CompilerParams(
            # Per-block partials -> no cross-step state -> fully parallel
            # (v7x can shard the batch axis across both TensorCores).
            dimension_semantics=("parallel",),
            vmem_limit_bytes=vmem_limit,
        ),
        cost_estimate=cost,
    )(pred2d, target2d, ones_bd)

    total = jnp.sum(partials)                    # only [:, 0, 0] is non-zero
    if reduction == "mean":
        total = total / jnp.float32(B * (T - 1))
    return total


def _reference(pred_abs, target_abs, reduction="mean"):
    pred_steps = pred_abs[:, 1:, :] - pred_abs[:, :-1, :]
    target_steps = target_abs[:, 1:, :] - target_abs[:, :-1, :]
    pred_dists = jnp.linalg.norm(pred_steps, axis=2)
    target_dists = jnp.linalg.norm(target_steps, axis=2)
    sq = (pred_dists - target_dists) ** 2
    return jnp.mean(sq) if reduction == "mean" else jnp.sum(sq)


if __name__ == "__main__":
    key = jax.random.PRNGKey(0)
    k1, k2, k3, k4 = jax.random.split(key, 4)

    # Case 1: module-scale input (single grid step).
    B, T, D = 2, 8, 32
    pred_abs = jax.random.normal(k1, (B, T, D), dtype=jnp.float32)
    target_abs = jax.random.normal(k2, (B, T, D), dtype=jnp.float32)

    loss = jax.block_until_ready(step_distance_loss(pred_abs, target_abs))
    ref = jax.block_until_ready(_reference(pred_abs, target_abs))
    assert jnp.allclose(loss, ref, rtol=1e-3, atol=1e-5), (loss, ref)

    loss_sum = jax.block_until_ready(
        step_distance_loss(pred_abs, target_abs, reduction="sum"))
    ref_sum = jax.block_until_ready(
        _reference(pred_abs, target_abs, reduction="sum"))
    assert jnp.allclose(loss_sum, ref_sum, rtol=1e-3, atol=1e-5), (loss_sum, ref_sum)

    # Case 2: multi-block parallel grid with a ragged last block (forced small
    # block_b) to exercise the per-block partials + row-masking path.
    B2, T2, D2 = 37, 8, 32
    pred2 = jax.random.normal(k3, (B2, T2, D2), dtype=jnp.float32)
    target2 = jax.random.normal(k4, (B2, T2, D2), dtype=jnp.float32)

    loss2 = jax.block_until_ready(step_distance_loss(pred2, target2, block_b=8))
    ref2 = jax.block_until_ready(_reference(pred2, target2))
    assert jnp.allclose(loss2, ref2, rtol=1e-3, atol=1e-5), (loss2, ref2)

    print("KERNEL_OK")
</pallas_src>

<mosaic_0001>
module attributes {stable_mosaic.version = 11 : i64} {
  func.func @_step_distance_loss_kernel(%arg0: i32, %arg1: memref<2x256xf32, #tpu.memory_space<vmem>>, %arg2: memref<2x256xf32, #tpu.memory_space<vmem>>, %arg3: memref<224x7xf32, #tpu.memory_space<vmem>>, %arg4: memref<1x8x128xf32, #tpu.memory_space<vmem>>) attributes {dimension_semantics = [#tpu.dimension_semantics<parallel>], iteration_bounds = array<i64: 1>, scalar_prefetch = 0 : i64, scratch_operands = 0 : i64, tpu.core_type = #tpu.core_type<tc>, window_params = [{transform_indices = @transform_0, window_bounds = array<i64: 2, 256>}, {transform_indices = @transform_1, window_bounds = array<i64: 2, 256>}, {pipeline_mode = #tpu.pipeline_mode<synchronous>, transform_indices = @transform_2, window_bounds = array<i64: 224, 7>}, {transform_indices = @transform_3, window_bounds = array<i64: 1, 8, 128>}]} {
    %c0 = arith.constant 0 : index
    %c0_0 = arith.constant 0 : index
    %0 = vector.load %arg1[%c0, %c0_0] : memref<2x256xf32, #tpu.memory_space<vmem>>, vector<2x256xf32>
    %c0_1 = arith.constant 0 : index
    %c0_2 = arith.constant 0 : index
    %1 = vector.load %arg2[%c0_1, %c0_2] : memref<2x256xf32, #tpu.memory_space<vmem>>, vector<2x256xf32>
    %2 = vector.extract_strided_slice %0 {offsets = [0, 32], sizes = [2, 224], strides = [1, 1]} : vector<2x256xf32> to vector<2x224xf32>
    %3 = vector.extract_strided_slice %0 {offsets = [0, 0], sizes = [2, 224], strides = [1, 1]} : vector<2x256xf32> to vector<2x224xf32>
    %4 = arith.subf %2, %3 : vector<2x224xf32>
    %5 = vector.extract_strided_slice %1 {offsets = [0, 32], sizes = [2, 224], strides = [1, 1]} : vector<2x256xf32> to vector<2x224xf32>
    %6 = vector.extract_strided_slice %1 {offsets = [0, 0], sizes = [2, 224], strides = [1, 1]} : vector<2x256xf32> to vector<2x224xf32>
    %7 = arith.subf %5, %6 : vector<2x224xf32>
    %8 = arith.mulf %4, %4 : vector<2x224xf32>
    %9 = arith.mulf %7, %7 : vector<2x224xf32>
    %c0_3 = arith.constant 0 : index
    %c0_4 = arith.constant 0 : index
    %10 = vector.load %arg3[%c0_3, %c0_4] : memref<224x7xf32, #tpu.memory_space<vmem>>, vector<224x7xf32>
    %11 = arith.truncf %8 : vector<2x224xf32> to vector<2x224xbf16>
    %12 = arith.extf %11 : vector<2x224xbf16> to vector<2x224xf32>
    %13 = arith.subf %8, %12 : vector<2x224xf32>
    %cst = arith.constant dense<0.000000e+00> : vector<2x7xf32>
    %14 = tpu.matmul %12, %10, %cst {dimension_numbers = #tpu.dot_dimension_numbers<[1], [0], [0], [1], [0, 0, 1, 1], [], []>} : vector<2x224xf32>, vector<224x7xf32>, vector<2x7xf32> -> vector<2x7xf32>
    %cst_5 = arith.constant dense<0.000000e+00> : vector<2x7xf32>
    %15 = tpu.matmul %13, %10, %cst_5 {dimension_numbers = #tpu.dot_dimension_numbers<[1], [0], [0], [1], [0, 0, 1, 1], [], []>} : vector<2x224xf32>, vector<224x7xf32>, vector<2x7xf32> -> vector<2x7xf32>
    %16 = arith.addf %14, %15 : vector<2x7xf32>
    %17 = arith.truncf %9 : vector<2x224xf32> to vector<2x224xbf16>
    %18 = arith.extf %17 : vector<2x224xbf16> to vector<2x224xf32>
    %19 = arith.subf %9, %18 : vector<2x224xf32>
    %cst_6 = arith.constant dense<0.000000e+00> : vector<2x7xf32>
    %20 = tpu.matmul %18, %10, %cst_6 {dimension_numbers = #tpu.dot_dimension_numbers<[1], [0], [0], [1], [0, 0, 1, 1], [], []>} : vector<2x224xf32>, vector<224x7xf32>, vector<2x7xf32> -> vector<2x7xf32>
    %cst_7 = arith.constant dense<0.000000e+00> : vector<2x7xf32>
    %21 = tpu.matmul %19, %10, %cst_7 {dimension_numbers = #tpu.dot_dimension_numbers<[1], [0], [0], [1], [0, 0, 1, 1], [], []>} : vector<2x224xf32>, vector<224x7xf32>, vector<2x7xf32> -> vector<2x7xf32>
    %22 = arith.addf %20, %21 : vector<2x7xf32>
    %23 = math.sqrt %16 : vector<2x7xf32>
    %24 = math.sqrt %22 : vector<2x7xf32>
    %25 = arith.subf %23, %24 : vector<2x7xf32>
    %26 = arith.mulf %25, %25 : vector<2x7xf32>
    %27 = tpu.iota {dimensions = array<i32: 0>} : vector<2x7xi32>
    %c2_i32 = arith.constant 2 : i32
    %28 = arith.muli %arg0, %c2_i32 : i32
    %29 = vector.broadcast %28 : i32 to vector<2x7xi32>
    %30 = arith.addi %27, %29 : vector<2x7xi32>
    %c2_i32_8 = arith.constant 2 : i32
    %31 = vector.broadcast %c2_i32_8 : i32 to vector<2x7xi32>
    %32 = arith.cmpi slt, %30, %31 : vector<2x7xi32>
    %cst_9 = arith.constant 0.000000e+00 : f32
    %33 = vector.broadcast %cst_9 : f32 to vector<2x7xf32>
    %34 = arith.select %32, %26, %33 : vector<2x7xi1>, vector<2x7xf32>
    %35 = vector.shape_cast %34 : vector<2x7xf32> to vector<1x2x7xf32>
    %cst_10 = arith.constant dense<0.000000e+00> : vector<1xf32>
    %36 = vector.multi_reduction <add>, %35, %cst_10 [1, 2] : vector<1x2x7xf32> to vector<1xf32>
    %37 = vector.shape_cast %36 : vector<1xf32> to vector<1x1x1xf32>
    %38 = vector.extract %37[0, 0, 0] : f32 from vector<1x1x1xf32>
    %39 = tpu.iota {dimensions = array<i32: 1>} : vector<1x8x128xi32>
    %40 = tpu.iota {dimensions = array<i32: 2>} : vector<1x8x128xi32>
    %c0_i32 = arith.constant 0 : i32
    %41 = vector.broadcast %c0_i32 : i32 to vector<1x8x128xi32>
    %42 = arith.cmpi eq, %39, %41 : vector<1x8x128xi32>
    %c0_i32_11 = arith.constant 0 : i32
    %43 = vector.broadcast %c0_i32_11 : i32 to vector<1x8x128xi32>
    %44 = arith.cmpi eq, %40, %43 : vector<1x8x128xi32>
    %45 = arith.andi %42, %44 : vector<1x8x128xi1>
    %46 = arith.extui %45 : vector<1x8x128xi1> to vector<1x8x128xi32>
    %47 = arith.sitofp %46 : vector<1x8x128xi32> to vector<1x8x128xf32>
    %48 = vector.broadcast %38 : f32 to vector<1x8x128xf32>
    %49 = arith.mulf %47, %48 : vector<1x8x128xf32>
    %c0_12 = arith.constant 0 : index
    %c0_13 = arith.constant 0 : index
    %c0_14 = arith.constant 0 : index
    %50 = vector.load %arg4[%c0_12, %c0_13, %c0_14] : memref<1x8x128xf32, #tpu.memory_space<vmem>>, vector<1x8x128xf32>
    tpu.vector_store %arg4[%c0_12, %c0_13, %c0_14], %49 {strides = array<i32>} : memref<1x8x128xf32, #tpu.memory_space<vmem>>, vector<1x8x128xf32>,
    return
  }
  func.func @transform_0(%arg0: i32) -> (i32, i32) {
    %c0_i32 = arith.constant 0 : i32
    %c0_i32_0 = arith.constant 0 : i32
    return %arg0, %c0_i32 : i32, i32
  }
  func.func @transform_1(%arg0: i32) -> (i32, i32) {
    %c0_i32 = arith.constant 0 : i32
    %c0_i32_0 = arith.constant 0 : i32
    return %arg0, %c0_i32 : i32, i32
  }
  func.func @transform_2(%arg0: i32) -> (i32, i32) {
    %c0_i32 = arith.constant 0 : i32
    %c0_i32_0 = arith.constant 0 : i32
    %c0_i32_1 = arith.constant 0 : i32
    return %c0_i32, %c0_i32_0 : i32, i32
  }
  func.func @transform_3(%arg0: i32) -> (i32, i32, i32) {
    %c0_i32 = arith.constant 0 : i32
    %c0_i32_0 = arith.constant 0 : i32
    %c0_i32_1 = arith.constant 0 : i32
    return %arg0, %c0_i32, %c0_i32_0 : i32, i32, i32
  }
}

</mosaic_0001>

<llo_original>
// kernel: tpu_custom_call.1
$region0: #{tpu_custom_call.1}
  #allocation0 [shape = 'u32[]', space=smem, size = 0x4, offset = 0x4, fixed_abs, tag = 'smem constant byte address 0x4 - core index']
  #allocation1 [shape = 'u32[144,128]{1,0:T(1,128)}', space=vmem, size = 0x12000, scoped, tag = 'internal scratch']
  %s0 = inlined_call_operand.vmem [shape: f32[2,256], index: 0, kind: input, shape index: {}]
  %s1 = inlined_call_operand.vmem [shape: f32[2,256], index: 1, kind: input, shape index: {}]
  %s2 = inlined_call_operand.vmem [shape: f32[224,7], index: 2, kind: input, shape index: {}]
  %s3 = inlined_call_operand.hbm [shape: f32[1,8,128], index: 3, kind: output, shape index: {}]
  %s4 = sld [smem:[#allocation0]]
  $region22: #{tpu_custom_call.1} parent=0
    _
  %s6 = ssub.s32 1, %s4
  %s7 = scalar_select 0, %s6, %s4
  $region1: #{tpu_custom_call.1} parent=0
    #allocation2 [shape = 'u8[4096]{0}', space=vmem, size = 0x1000, scoped, tag = 'output window, operand 0, single buffered']
    #allocation3 [shape = 's32[1]{0}', space=sflag, size = 0x4, scoped, tag = 'scoped memory for tpu_custom_call.1']
    %8 = vsyncpa [#allocation3], 0
    // Predicated region
    $region2: #{tpu_custom_call.1} parent=1 // pred_check
      _
    $region3: #{tpu_custom_call.1} parent=1 // pred_check_branch
      %10 = sbr.rel (0) target = $region5
    $region4: #{tpu_custom_call.1} parent=1 // pred_region
      _
    $region5: #{tpu_custom_call.1} parent=1 // pred_fallthru
      _
    // Predicated region
    $region6: #{tpu_custom_call.1} parent=1 // pred_check
      _
    $region7: #{tpu_custom_call.1} parent=1 // pred_check_branch
      %12 = sbr.rel (0) target = $region9
    $region8: #{tpu_custom_call.1} parent=1 // pred_region
      _
    $region9: #{tpu_custom_call.1} parent=1 // pred_fallthru
      _
    // Predicated region
    $region10: #{tpu_custom_call.1} parent=1 // pred_check
      _
    $region11: #{tpu_custom_call.1} parent=1 // pred_check_branch
      %14 = sbr.rel (0) target = $region13
    $region12: #{tpu_custom_call.1} parent=1 // pred_region
      _
    $region13: #{tpu_custom_call.1} parent=1 // pred_fallthru
      _
    %v15 = vld [vmem:[%s0] sm:$0xf]
    %v16 = vld [vmem:[%s1] sm:$0xf]
    %18 = vrot.lane.b32.xlu0 %v15, 32
    %v19 = vpop.permute.xlu0 %18
    %v20 = vrot.slane %v19, 6
    %vm21 = vcmask 261120
    %v22 = vsel %vm21, %v20, %v19
    %v24 = vsub.f32 %v15, %v22
    %26 = vrot.lane.b32.xlu0 %v16, 32
    %v27 = vpop.permute.xlu0 %26
    %v28 = vrot.slane %v27, 6
    %v29 = vsel %vm21, %v28, %v27
    %v31 = vsub.f32 %v16, %v29
    %v32 = vmul.f32 %v24, %v24
    %v33 = vmul.f32 %v31, %v31
    %v34 = vld [vmem:[%s2] sm:$0xff]
    %v35 = vld [vmem:[%s2 + $0x8] sm:$0xff]
    %v36 = vld [vmem:[%s2 + $0x10] sm:$0xff]
    %v37 = vld [vmem:[%s2 + $0x18] sm:$0xff]
    %v38 = vld [vmem:[%s2 + $0x20] sm:$0xff]
    %v39 = vld [vmem:[%s2 + $0x28] sm:$0xff]
    %v40 = vld [vmem:[%s2 + $0x30] sm:$0xff]
    %v41 = vld [vmem:[%s2 + $0x38] sm:$0xff]
    %v42 = vld [vmem:[%s2 + $0x40] sm:$0xff]
    %v43 = vld [vmem:[%s2 + $0x48] sm:$0xff]
    %v44 = vld [vmem:[%s2 + $0x50] sm:$0xff]
    %v45 = vld [vmem:[%s2 + $0x58] sm:$0xff]
    %v46 = vld [vmem:[%s2 + $0x60] sm:$0xff]
    %v47 = vld [vmem:[%s2 + $0x68] sm:$0xff]
    %v48 = vld [vmem:[%s2 + $0x70] sm:$0xff]
    %v49 = vld [vmem:[%s2 + $0x78] sm:$0xff]
    %v50 = vld [vmem:[%s2 + $0x80] sm:$0xff]
    %v51 = vld [vmem:[%s2 + $0x88] sm:$0xff]
    %v52 = vld [vmem:[%s2 + $0x90] sm:$0xff]
    %v53 = vld [vmem:[%s2 + $0x98] sm:$0xff]
    %v54 = vld [vmem:[%s2 + $0xa0] sm:$0xff]
    %v55 = vld [vmem:[%s2 + $0xa8] sm:$0xff]
    %v56 = vld [vmem:[%s2 + $0xb0] sm:$0xff]
    %v57 = vld [vmem:[%s2 + $0xb8] sm:$0xff]
    %v58 = vld [vmem:[%s2 + $0xc0] sm:$0xff]
    %v59 = vld [vmem:[%s2 + $0xc8] sm:$0xff]
    %v60 = vld [vmem:[%s2 + $0xd0] sm:$0xff]
    %v61 = vld [vmem:[%s2 + $0xd8] sm:$0xff]
    %v64 = vunpack.c.l.s4 1983009808
    %v65 = vunpack.c.0.s8 %v64
    %v66 = vlaneseq
    %v67 = vshrl.u32 %v66, 7
    %v68 = vsub.s32 %v65, %v67
    %v69 = vrot.slane %v32, %v68
    %v70 = vcombine.high %v69, %v69
    %v73 = vpack.c.bf16 %v69, %v69
    %v74 = vpack.c.bf16 %v70, %v70
    %v75 = vunpack.c.l.bf16 %v73
    %v76 = vunpack.c.l.bf16 %v74
    %v79 = vcombine.low %v75, %v76
    %v81 = vunpack.c.l.s4 1983009808
    %v82 = vunpack.c.0.s8 %v81
    %v83 = vlaneseq
    %v84 = vshrl.u32 %v83, 7
    %v85 = vsub.s32 %v82, %v84
    %v86 = vrot.slane %v79, %v85
    %v88 = vsub.f32 %v32, %v86
    %v91 = vunpack.c.l.s4 1983009808
    %v92 = vunpack.c.0.s8 %v91
    %v93 = vlaneseq
    %v94 = vshrl.u32 %v93, 7
    %v95 = vsub.s32 %v92, %v94
    %v96 = vrot.slane %v88, %v95
    %v97 = vcombine.high %v96, %v96
    %98 = vrot.lane.b32.xlu0 %v96, 96
    %v99 = vpop.permute.xlu0 %98
    %100 = vrot.lane.b32.xlu0 %v97, 96
    %v101 = vpop.permute.xlu0 %100
    %vm102 = vcmask 785408
    %v103 = vsel %vm102, %v99, %v101
    %v105 = vsel %vm102, %v101, 0
    %107 = vmatprep.subr.mxu0 0.0
    %108 = vmatpush1.msra.mxu0 %v34
    %109 = vmatprep.subr.mxu0 0.0
    %110 = vmatpush1.msra.mxu0 %v35
    %111 = vmatprep.subr.mxu0 0.0
    %112 = vmatpush1.msra.mxu0 %v36
    %113 = vmatprep.subr.mxu0 0.0
    %114 = vmatpush1.msra.mxu0 %v37
    %115 = vmatprep.subr.mxu0 0.0
    %116 = vmatpush1.msra.mxu0 %v38
    %117 = vmatprep.subr.mxu0 0.0
    %118 = vmatpush1.msra.mxu0 %v39
    %119 = vmatprep.subr.mxu0 0.0
    %120 = vmatpush1.msra.mxu0 %v40
    %121 = vmatprep.subr.mxu0 0.0
    %122 = vmatpush1.msra.mxu0 %v41
    %123 = vmatprep.subr.mxu0 0.0
    %124 = vmatpush1.msra.mxu0 %v42
    %125 = vmatprep.subr.mxu0 0.0
    %126 = vmatpush1.msra.mxu0 %v43
    %127 = vmatprep.subr.mxu0 0.0
    %128 = vmatpush1.msra.mxu0 %v44
    %129 = vmatprep.subr.mxu0 0.0
    %130 = vmatpush1.msra.mxu0 %v45
    %131 = vmatprep.subr.mxu0 0.0
    %132 = vmatpush1.msra.mxu0 %v46
    %133 = vmatprep.subr.mxu0 0.0
    %134 = vmatpush1.msra.mxu0 %v47
    %135 = vmatprep.subr.mxu0 0.0
    %136 = vmatpush1.msra.mxu0 %v48
    %137 = vmatprep.subr.mxu0 0.0
    %138 = vmatpush1.msra.mxu0 %v49
    %139 = vmatprep.subr.mxu0 0.0
    %140 = vmatpush1.msra.mxu0 %v50
    %141 = vmatprep.subr.mxu0 0.0
    %142 = vmatpush1.msra.mxu0 %v51
    %143 = vmatprep.subr.mxu0 0.0
    %144 = vmatpush1.msra.mxu0 %v52
    %145 = vmatprep.subr.mxu0 0.0
    %146 = vmatpush1.msra.mxu0 %v53
    %147 = vmatprep.subr.mxu0 0.0
    %148 = vmatpush1.msra.mxu0 %v54
    %149 = vmatprep.subr.mxu0 0.0
    %150 = vmatpush1.msra.mxu0 %v55
    %151 = vmatprep.subr.mxu0 0.0
    %152 = vmatpush1.msra.mxu0 %v56
    %153 = vmatprep.subr.mxu0 0.0
    %154 = vmatpush1.msra.mxu0 %v57
    %155 = vmatprep.subr.mxu0 0.0
    %156 = vmatpush1.msra.mxu0 %v58
    %157 = vmatprep.subr.mxu0 0.0
    %158 = vmatpush1.msra.mxu0 %v59
    %159 = vmatprep.subr.mxu0 0.0
    %160 = vmatpush1.msra.mxu0 %v60
    %161 = vmatprep.subr.mxu0 0.0
    %162 = vmatpush1.msra.mxu0 %v61
    %163 = vmatprep.subr.mxu0 0.0
    %164 = vmatpush1.msra.mxu0 0.0
    %165 = vmatprep.subr.mxu0 0.0
    %166 = vmatpush1.msra.mxu0 0.0
    %167 = vmatprep.subr.mxu0 0.0
    %168 = vmatpush1.msra.mxu0 0.0
    %169 = vmatprep.subr.mxu0 0.0
    %170 = vmatpush1.msra.mxu0 0.0
    %171 = vmatprep.mubr.f32.mxu0 %v105
    %172 = vmatmul.mubr.f32.gmra.mrb[0].mxu0 %v103
    %v173 = vpop.f32.mrb[0].mxu0
    %v174 = vadd.f32 0.0, %v173
    %v175 = vpop.f32.mrb[0].mxu0
    %176 = vdwg.mxu0
    %177 = vrot.lane.b32.xlu0 %v75, 96
    %v178 = vpop.permute.xlu0 %177
    %179 = vrot.lane.b32.xlu0 %v76, 96
    %v180 = vpop.permute.xlu0 %179
    %v181 = vsel %vm102, %v178, %v180
    %v183 = vsel %vm102, %v180, 0
    %185 = vmatprep.subr.mxu0 0.0
    %186 = vmatpush1.msra.mxu0 %v34
    %187 = vmatprep.subr.mxu0 0.0
    %188 = vmatpush1.msra.mxu0 %v35
    %189 = vmatprep.subr.mxu0 0.0
    %190 = vmatpush1.msra.mxu0 %v36
    %191 = vmatprep.subr.mxu0 0.0
    %192 = vmatpush1.msra.mxu0 %v37
    %193 = vmatprep.subr.mxu0 0.0
    %194 = vmatpush1.msra.mxu0 %v38
    %195 = vmatprep.subr.mxu0 0.0
    %196 = vmatpush1.msra.mxu0 %v39
    %197 = vmatprep.subr.mxu0 0.0
    %198 = vmatpush1.msra.mxu0 %v40
    %199 = vmatprep.subr.mxu0 0.0
    %200 = vmatpush1.msra.mxu0 %v41
    %201 = vmatprep.subr.mxu0 0.0
    %202 = vmatpush1.msra.mxu0 %v42
    %203 = vmatprep.subr.mxu0 0.0
    %204 = vmatpush1.msra.mxu0 %v43
    %205 = vmatprep.subr.mxu0 0.0
    %206 = vmatpush1.msra.mxu0 %v44
    %207 = vmatprep.subr.mxu0 0.0
    %208 = vmatpush1.msra.mxu0 %v45
    %209 = vmatprep.subr.mxu0 0.0
    %210 = vmatpush1.msra.mxu0 %v46
    %211 = vmatprep.subr.mxu0 0.0
    %212 = vmatpush1.msra.mxu0 %v47
    %213 = vmatprep.subr.mxu0 0.0
    %214 = vmatpush1.msra.mxu0 %v48
    %215 = vmatprep.subr.mxu0 0.0
    %216 = vmatpush1.msra.mxu0 %v49
    %217 = vmatprep.subr.mxu0 0.0
    %218 = vmatpush1.msra.mxu0 %v50
    %219 = vmatprep.subr.mxu0 0.0
    %220 = vmatpush1.msra.mxu0 %v51
    %221 = vmatprep.subr.mxu0 0.0
    %222 = vmatpush1.msra.mxu0 %v52
    %223 = vmatprep.subr.mxu0 0.0
    %224 = vmatpush1.msra.mxu0 %v53
    %225 = vmatprep.subr.mxu0 0.0
    %226 = vmatpush1.msra.mxu0 %v54
    %227 = vmatprep.subr.mxu0 0.0
    %228 = vmatpush1.msra.mxu0 %v55
    %229 = vmatprep.subr.mxu0 0.0
    %230 = vmatpush1.msra.mxu0 %v56
    %231 = vmatprep.subr.mxu0 0.0
    %232 = vmatpush1.msra.mxu0 %v57
    %233 = vmatprep.subr.mxu0 0.0
    %234 = vmatpush1.msra.mxu0 %v58
    %235 = vmatprep.subr.mxu0 0.0
    %236 = vmatpush1.msra.mxu0 %v59
    %237 = vmatprep.subr.mxu0 0.0
    %238 = vmatpush1.msra.mxu0 %v60
    %239 = vmatprep.subr.mxu0 0.0
    %240 = vmatpush1.msra.mxu0 %v61
    %241 = vmatprep.subr.mxu0 0.0
    %242 = vmatpush1.msra.mxu0 0.0
    %243 = vmatprep.subr.mxu0 0.0
    %244 = vmatpush1.msra.mxu0 0.0
    %245 = vmatprep.subr.mxu0 0.0
    %246 = vmatpush1.msra.mxu0 0.0
    %247 = vmatprep.subr.mxu0 0.0
    %248 = vmatpush1.msra.mxu0 0.0
    %249 = vmatprep.mubr.f32.mxu0 %v183
    %250 = vmatmul.mubr.f32.gmra.mrb[0].mxu0 %v181
    %v251 = vpop.f32.mrb[0].mxu0
    %v252 = vadd.f32 %v174, %v251
    %v253 = vpop.f32.mrb[0].mxu0
    %254 = vdwg.mxu0
    %v257 = vunpack.c.l.s4 1983009808
    %v258 = vunpack.c.0.s8 %v257
    %v259 = vlaneseq
    %v260 = vshrl.u32 %v259, 7
    %v261 = vsub.s32 %v258, %v260
    %v262 = vrot.slane %v33, %v261
    %v263 = vcombine.high %v262, %v262
    %v266 = vpack.c.bf16 %v262, %v262
    %v267 = vpack.c.bf16 %v263, %v263
    %v268 = vunpack.c.l.bf16 %v266
    %v269 = vunpack.c.l.bf16 %v267
    %v272 = vcombine.low %v268, %v269
    %v274 = vunpack.c.l.s4 1983009808
    %v275 = vunpack.c.0.s8 %v274
    %v276 = vlaneseq
    %v277 = vshrl.u32 %v276, 7
    %v278 = vsub.s32 %v275, %v277
    %v279 = vrot.slane %v272, %v278
    %v281 = vsub.f32 %v33, %v279
    %v284 = vunpack.c.l.s4 1983009808
    %v285 = vunpack.c.0.s8 %v284
    %v286 = vlaneseq
    %v287 = vshrl.u32 %v286, 7
    %v288 = vsub.s32 %v285, %v287
    %v289 = vrot.slane %v281, %v288
    %v290 = vcombine.high %v289, %v289
    %291 = vrot.lane.b32.xlu0 %v289, 96
    %v292 = vpop.permute.xlu0 %291
    %293 = vrot.lane.b32.xlu0 %v290, 96
    %v294 = vpop.permute.xlu0 %293
    %v295 = vsel %vm102, %v292, %v294
    %v297 = vsel %vm102, %v294, 0
    %299 = vmatprep.subr.mxu0 0.0
    %300 = vmatpush1.msra.mxu0 %v34
    %301 = vmatprep.subr.mxu0 0.0
    %302 = vmatpush1.msra.mxu0 %v35
    %303 = vmatprep.subr.mxu0 0.0
    %304 = vmatpush1.msra.mxu0 %v36
    %305 = vmatprep.subr.mxu0 0.0
    %306 = vmatpush1.msra.mxu0 %v37
    %307 = vmatprep.subr.mxu0 0.0
    %308 = vmatpush1.msra.mxu0 %v38
    %309 = vmatprep.subr.mxu0 0.0
    %310 = vmatpush1.msra.mxu0 %v39
    %311 = vmatprep.subr.mxu0 0.0
    %312 = vmatpush1.msra.mxu0 %v40
    %313 = vmatprep.subr.mxu0 0.0
    %314 = vmatpush1.msra.mxu0 %v41
    %315 = vmatprep.subr.mxu0 0.0
    %316 = vmatpush1.msra.mxu0 %v42
    %317 = vmatprep.subr.mxu0 0.0
    %318 = vmatpush1.msra.mxu0 %v43
    %319 = vmatprep.subr.mxu0 0.0
    %320 = vmatpush1.msra.mxu0 %v44
    %321 = vmatprep.subr.mxu0 0.0
    %322 = vmatpush1.msra.mxu0 %v45
    %323 = vmatprep.subr.mxu0 0.0
    %324 = vmatpush1.msra.mxu0 %v46
    %325 = vmatprep.subr.mxu0 0.0
    %326 = vmatpush1.msra.mxu0 %v47
    %327 = vmatprep.subr.mxu0 0.0
    %328 = vmatpush1.msra.mxu0 %v48
    %329 = vmatprep.subr.mxu0 0.0
    %330 = vmatpush1.msra.mxu0 %v49
    %331 = vmatprep.subr.mxu0 0.0
    %332 = vmatpush1.msra.mxu0 %v50
    %333 = vmatprep.subr.mxu0 0.0
    %334 = vmatpush1.msra.mxu0 %v51
    %335 = vmatprep.subr.mxu0 0.0
    %336 = vmatpush1.msra.mxu0 %v52
    %337 = vmatprep.subr.mxu0 0.0
    %338 = vmatpush1.msra.mxu0 %v53
    %339 = vmatprep.subr.mxu0 0.0
    %340 = vmatpush1.msra.mxu0 %v54
    %341 = vmatprep.subr.mxu0 0.0
    %342 = vmatpush1.msra.mxu0 %v55
    %343 = vmatprep.subr.mxu0 0.0
    %344 = vmatpush1.msra.mxu0 %v56
    %345 = vmatprep.subr.mxu0 0.0
    %346 = vmatpush1.msra.mxu0 %v57
    %347 = vmatprep.subr.mxu0 0.0
    %348 = vmatpush1.msra.mxu0 %v58
    %349 = vmatprep.subr.mxu0 0.0
    %350 = vmatpush1.msra.mxu0 %v59
    %351 = vmatprep.subr.mxu0 0.0
    %352 = vmatpush1.msra.mxu0 %v60
    %353 = vmatprep.subr.mxu0 0.0
    %354 = vmatpush1.msra.mxu0 %v61
    %355 = vmatprep.subr.mxu0 0.0
    %356 = vmatpush1.msra.mxu0 0.0
    %357 = vmatprep.subr.mxu0 0.0
    %358 = vmatpush1.msra.mxu0 0.0
    %359 = vmatprep.subr.mxu0 0.0
    %360 = vmatpush1.msra.mxu0 0.0
    %361 = vmatprep.subr.mxu0 0.0
    %362 = vmatpush1.msra.mxu0 0.0
    %363 = vmatprep.mubr.f32.mxu0 %v297
    %364 = vmatmul.mubr.f32.gmra.mrb[0].mxu0 %v295
    %v365 = vpop.f32.mrb[0].mxu0
    %v366 = vadd.f32 0.0, %v365
    %v367 = vpop.f32.mrb[0].mxu0
    %368 = vdwg.mxu0
    %369 = vrot.lane.b32.xlu0 %v268, 96
    %v370 = vpop.permute.xlu0 %369
    %371 = vrot.lane.b32.xlu0 %v269, 96
    %v372 = vpop.permute.xlu0 %371
    %v373 = vsel %vm102, %v370, %v372
    %v375 = vsel %vm102, %v372, 0
    %377 = vmatprep.subr.mxu0 0.0
    %378 = vmatpush1.msra.mxu0 %v34
    %379 = vmatprep.subr.mxu0 0.0
    %380 = vmatpush1.msra.mxu0 %v35
    %381 = vmatprep.subr.mxu0 0.0
    %382 = vmatpush1.msra.mxu0 %v36
    %383 = vmatprep.subr.mxu0 0.0
    %384 = vmatpush1.msra.mxu0 %v37
    %385 = vmatprep.subr.mxu0 0.0
    %386 = vmatpush1.msra.mxu0 %v38
    %387 = vmatprep.subr.mxu0 0.0
    %388 = vmatpush1.msra.mxu0 %v39
    %389 = vmatprep.subr.mxu0 0.0
    %390 = vmatpush1.msra.mxu0 %v40
    %391 = vmatprep.subr.mxu0 0.0
    %392 = vmatpush1.msra.mxu0 %v41
    %393 = vmatprep.subr.mxu0 0.0
    %394 = vmatpush1.msra.mxu0 %v42
    %395 = vmatprep.subr.mxu0 0.0
    %396 = vmatpush1.msra.mxu0 %v43
    %397 = vmatprep.subr.mxu0 0.0
    %398 = vmatpush1.msra.mxu0 %v44
    %399 = vmatprep.subr.mxu0 0.0
    %400 = vmatpush1.msra.mxu0 %v45
    %401 = vmatprep.subr.mxu0 0.0
    %402 = vmatpush1.msra.mxu0 %v46
    %403 = vmatprep.subr.mxu0 0.0
    %404 = vmatpush1.msra.mxu0 %v47
    %405 = vmatprep.subr.mxu0 0.0
    %406 = vmatpush1.msra.mxu0 %v48
    %407 = vmatprep.subr.mxu0 0.0
    %408 = vmatpush1.msra.mxu0 %v49
    %409 = vmatprep.subr.mxu0 0.0
    %410 = vmatpush1.msra.mxu0 %v50
    %411 = vmatprep.subr.mxu0 0.0
    %412 = vmatpush1.msra.mxu0 %v51
    %413 = vmatprep.subr.mxu0 0.0
    %414 = vmatpush1.msra.mxu0 %v52
    %415 = vmatprep.subr.mxu0 0.0
    %416 = vmatpush1.msra.mxu0 %v53
    %417 = vmatprep.subr.mxu0 0.0
    %418 = vmatpush1.msra.mxu0 %v54
    %419 = vmatprep.subr.mxu0 0.0
    %420 = vmatpush1.msra.mxu0 %v55
    %421 = vmatprep.subr.mxu0 0.0
    %422 = vmatpush1.msra.mxu0 %v56
    %423 = vmatprep.subr.mxu0 0.0
    %424 = vmatpush1.msra.mxu0 %v57
    %425 = vmatprep.subr.mxu0 0.0
    %426 = vmatpush1.msra.mxu0 %v58
    %427 = vmatprep.subr.mxu0 0.0
    %428 = vmatpush1.msra.mxu0 %v59
    %429 = vmatprep.subr.mxu0 0.0
    %430 = vmatpush1.msra.mxu0 %v60
    %431 = vmatprep.subr.mxu0 0.0
    %432 = vmatpush1.msra.mxu0 %v61
    %433 = vmatprep.subr.mxu0 0.0
    %434 = vmatpush1.msra.mxu0 0.0
    %435 = vmatprep.subr.mxu0 0.0
    %436 = vmatpush1.msra.mxu0 0.0
    %437 = vmatprep.subr.mxu0 0.0
    %438 = vmatpush1.msra.mxu0 0.0
    %439 = vmatprep.subr.mxu0 0.0
    %440 = vmatpush1.msra.mxu0 0.0
    %441 = vmatprep.mubr.f32.mxu0 %v375
    %442 = vmatmul.mubr.f32.gmra.mrb[0].mxu0 %v373
    %v443 = vpop.f32.mrb[0].mxu0
    %v444 = vadd.f32 %v366, %v443
    %v445 = vpop.f32.mrb[0].mxu0
    %446 = vdwg.mxu0
    %v447 = vrsqrt.pop %v252
    %v448 = vmul.f32 %v252, %v447
    %vm449 = vcmp.eq.f32.partialorder %v252, inf
    %v450 = vsel %vm449, %v252, %v448
    %vm451 = vcmp.eq.f32.partialorder %v252, 0.0
    %v452 = vand.u32 %v252, 2147483648
    %v453 = vsel %vm451, %v452, %v450
    %v454 = vrsqrt.pop %v444
    %v455 = vmul.f32 %v444, %v454
    %vm456 = vcmp.eq.f32.partialorder %v444, inf
    %v457 = vsel %vm456, %v444, %v455
    %vm458 = vcmp.eq.f32.partialorder %v444, 0.0
    %v459 = vand.u32 %v444, 2147483648
    %v460 = vsel %vm458, %v459, %v457
    %v461 = vsub.f32 %v453, %v460
    %v462 = vmul.f32 %v461, %v461
    %v463 = vlaneseq
    %v464 = vshrl.u32 %v463, 7
    %s465 = smul.u32 0, 2
    %v466 = vstv %s465
    %v467 = vadd.s32 %v464, %v466
    %vm468 = vcmp.lt.s32.totalorder %v467, 2
    %v469 = vsel %vm468, %v462, 0.0
    %vm470 = vcmask 50176
    %v471 = vsel %vm470, %v469, 0.0
    %472 = vadd.xlane.f32.xlu0 %v471
    %v473 = vpop.xlane.xlu0 %472
    %v474 = vrot.slane %v473, 4
    %v475 = vadd.f32 %v473, %v474
    %v476 = vrot.slane %v475, 2
    %v477 = vadd.f32 %v475, %v476
    %v478 = vrot.slane %v477, 1
    %v479 = vadd.f32 %v477, %v478
    %s480 = vtos %v479
    %v481 = vlaneseq
    %v482 = vand.u32 %v481, 127
    %vm483 = vcmp.eq.s32.totalorder %v464, 0
    %vm484 = vcmp.eq.s32.totalorder %v482, 0
    %vm485 = vmand %vm483, %vm484
    %v486 = vsel %vm485, 1, 0
    %v487 = vcvt.s32.f32 %v486
    %v488 = vstv %s480
    %v489 = vmul.f32 %v487, %v488
    %490 = vst [vmem:[#allocation2] sm:$0xff] %v489
    // Predicated region
    $region14: #{tpu_custom_call.1} parent=1 // pred_check
      _
    $region15: #{tpu_custom_call.1} parent=1 // pred_check_branch
      %492 = sbr.rel (0) target = $region17
    $region16: #{tpu_custom_call.1} parent=1 // pred_region
      %s494 = ssub.s32 128, 128
      %495 = vsyncadd [#allocation3], %s494
      %s497 = sshll.u32 [#allocation2], 4
      %s498 = int_to_ptr.vmem [resolvable:$true] %s497
      %500 = dma.vmem_to_hbm [thread:$0]  %s498, 128, %s3, [#allocation3]
    $region17: #{tpu_custom_call.1} parent=1 // pred_fallthru
      _
    // Predicated region
    $region18: #{tpu_custom_call.1} parent=1 // pred_check
      _
    $region19: #{tpu_custom_call.1} parent=1 // pred_check_branch
      %502 = sbr.rel (0) target = $region21
    $region20: #{tpu_custom_call.1} parent=1 // pred_region
      %503 = dma.done [#allocation3], 128
    $region21: #{tpu_custom_call.1} parent=1 // pred_fallthru
      _
    %504 = vsyncpa [#allocation3], 1

</llo_original>
